<compile_context>
chip_gen: v6e
topology: v6e:2x2x1
jax: 0.10.0
libtpu: 0.0.40
codegen_flags: <defaults>
</compile_context>

<pallas_src>
import jax
import jax.numpy as jnp
from jax import lax
from jax.experimental import pallas as pl
from jax.experimental.pallas import tpu as pltpu


# ------------------------- wrapper-side helpers -------------------------

def _tap_offsets(K, padding, dilation):
    """(dy, dx) input offset of each conv tap (PyTorch cross-correlation)."""
    return [(ki * dilation - padding, kj * dilation - padding)
            for ki in range(K) for kj in range(K)]


def _build_masks(offsets, H, W, rows):
    """(K*K, rows, H*W) f32 validity masks for zero-padded dilated taps.

    Built once in the wrapper (hoisted out of the kernel) and pre-broadcast
    over `rows` sublanes so the kernel never has to sublane-splat a (1, HW)
    mask.
    """
    hw = H * W
    xs = jnp.arange(hw, dtype=jnp.int32) % W
    ys = jnp.arange(hw, dtype=jnp.int32) // W
    per_tap = []
    for dy, dx in offsets:
        valid = ((xs + dx >= 0) & (xs + dx < W) &
                 (ys + dy >= 0) & (ys + dy < H))
        per_tap.append(valid.astype(jnp.float32))
    m = jnp.stack(per_tap, axis=0)                       # (K*K, hw)
    return jnp.broadcast_to(m[:, None, :], (len(offsets), rows, hw))


# ------------------------- in-kernel conv body -------------------------

def _conv_taps(x, w2d, bias, mask_ref, taps, c_in, hw):
    """One zero-padded KxK dilated conv on a (c_in, HW) image.

    x     : (c_in, hw) f32
    w2d   : (c_out, K*K*c_in) f32, column index = tap*c_in + ci (lane-dense)
    bias  : (c_out, 1) f32
    taps  : static list of (roll_shift, needs_mask)

    The channel contraction is an unrolled per-input-channel FMA: each step is
    a (c_out,1) x (1,hw) outer-product accumulate -- pure VALU work on full
    (c_out, hw) slabs, no cross-sublane reduce, no big temporaries.
    """
    c_out = w2d.shape[0]
    acc = jnp.zeros((c_out, hw), jnp.float32)
    for t, (shift, needs_mask) in enumerate(taps):
        # Lane rotation on the XLU; boundary mask (precomputed) restores the
        # zero-padding semantics.  Center tap touches no data at all.
        xs = x if shift == 0 else pltpu.roll(x, shift, axis=1)
        if needs_mask:
            xs = xs * mask_ref[t][:c_in, :]
        base = t * c_in
        for ci in range(c_in):
            acc = acc + w2d[:, base + ci:base + ci + 1] * xs[ci:ci + 1, :]
    return acc + bias


def _make_two_conv_kernel(N, c_in, c_mid, hw, taps):
    def kernel(x_ref, w1_ref, b1_ref, w2_ref, b2_ref, mask_ref, o_ref):
        w1 = w1_ref[...]                       # (c_mid, K*K*c_in)
        w2 = w2_ref[...]                       # (c_out, K*K*c_mid)
        b1 = b1_ref[...]                       # (c_mid, 1)
        b2 = b2_ref[...]                       # (c_out, 1)
        for n in range(N):                     # static unroll; single grid step
            x = x_ref[n]                       # (c_in, hw)
            h = _conv_taps(x, w1, b1, mask_ref, taps, c_in, hw)   # conv1
            y = _conv_taps(h, w2, b2, mask_ref, taps, c_mid, hw)  # conv2
            o_ref[n] = jnp.maximum(y, 0.0)                        # ReLU
    return kernel


def _make_folded_1x1_kernel(N, c_in, hw):
    """Typical oneConv instantiation (K=1, pad=0): both convs folded into one
    affine map in the wrapper; kernel does a single channel contraction."""
    def kernel(x_ref, w_ref, b_ref, o_ref):
        w = w_ref[...]                         # (c_out, c_in)
        b = b_ref[...]                         # (c_out, 1)
        c_out = w.shape[0]
        for n in range(N):
            x = x_ref[n]                       # (c_in, hw)
            acc = jnp.zeros((c_out, hw), jnp.float32)
            for ci in range(c_in):
                acc = acc + w[:, ci:ci + 1] * x[ci:ci + 1, :]
            o_ref[n] = jnp.maximum(acc + b, 0.0)
    return kernel


# ------------------------- wrapper -------------------------

def one_conv_forward(x_nchw, w1, b1, w2, b2, *, kernel_size, padding, dilation):
    """x_nchw: (N, c_in, H, W) f32 (PyTorch layout).
    w1: (c_mid, c_in, K, K), b1: (c_mid,), w2: (c_out, c_mid, K, K), b2: (c_out,)."""
    N, c_in, H, W = x_nchw.shape
    c_mid = w1.shape[0]
    c_out = w2.shape[0]
    K = kernel_size
    hw = H * W
    assert w1.shape == (c_mid, c_in, K, K)
    assert w2.shape == (c_out, c_mid, K, K)
    # Same-size convolution (holds for the oneConv configs in the model).
    assert 2 * padding == (K - 1) * dilation, "non size-preserving conv config"

    # Lane-dense layout: flattened NCHW, spatial on lanes (hw = 256 here).
    x_flat = x_nchw.reshape(N, c_in, hw).astype(jnp.float32)
    vmem = pl.BlockSpec(memory_space=pltpu.MemorySpace.VMEM)

    if K == 1:
        # Fold conv2(conv1(x)) into one affine map: Wf = W2 @ W1, bf = W2 @ b1 + b2.
        # Exact: the original module has no BN/activation between the two convs.
        w1m = w1.reshape(c_mid, c_in).astype(jnp.float32)
        w2m = w2.reshape(c_out, c_mid).astype(jnp.float32)
        wf = w2m @ w1m                                           # (c_out, c_in)
        bf = (w2m @ b1.astype(jnp.float32)
              + b2.astype(jnp.float32)).reshape(c_out, 1)
        out_flat = pl.pallas_call(
            _make_folded_1x1_kernel(N, c_in, hw),
            out_shape=jax.ShapeDtypeStruct((N, c_out, hw), jnp.float32),
            in_specs=[vmem, vmem, vmem],
            out_specs=vmem,
        )(x_flat, wf, bf)
        return out_flat.reshape(N, c_out, H, W)

    # General K: two-pass tap loop with precomputed boundary masks.
    offsets = _tap_offsets(K, padding, dilation)
    # pltpu.roll matches jnp.roll: out[p] = in[(p - shift) mod hw]; we need
    # out[p] = in[(p + off) mod hw], hence shift = (-off) mod hw.
    taps = [((-(dy * W + dx)) % hw, (dy, dx) != (0, 0)) for dy, dx in offsets]
    mask_rows = max(8, c_in, c_mid)
    masks = _build_masks(offsets, H, W, mask_rows)               # (K*K, rows, hw)

    # Lane-dense 2-D weight tiles, column index = tap*c_in + ci.
    w1_2d = jnp.transpose(w1, (0, 2, 3, 1)).reshape(c_mid, K * K * c_in).astype(jnp.float32)
    w2_2d = jnp.transpose(w2, (0, 2, 3, 1)).reshape(c_out, K * K * c_mid).astype(jnp.float32)
    b1_c = b1.reshape(c_mid, 1).astype(jnp.float32)
    b2_c = b2.reshape(c_out, 1).astype(jnp.float32)

    out_flat = pl.pallas_call(
        _make_two_conv_kernel(N, c_in, c_mid, hw, taps),
        out_shape=jax.ShapeDtypeStruct((N, c_out, hw), jnp.float32),
        in_specs=[vmem] * 6,
        out_specs=vmem,
    )(x_flat, w1_2d, b1_c, w2_2d, b2_c, masks)
    return out_flat.reshape(N, c_out, H, W)


# ------------------------- pure-JAX reference -------------------------

def one_conv_reference(x, w1, b1, w2, b2, *, padding, dilation):
    dn = ('NCHW', 'OIHW', 'NCHW')

    def conv(inp, w, b):
        y = lax.conv_general_dilated(
            inp, w, window_strides=(1, 1),
            padding=[(padding, padding), (padding, padding)],
            rhs_dilation=(dilation, dilation),
            dimension_numbers=dn)
        return y + b[None, :, None, None]

    h = conv(x, w1, b1)
    y = conv(h, w2, b2)
    return jnp.maximum(y, 0.0)


# ------------------------- main -------------------------

if __name__ == "__main__":
    N, C_in, H, W = 2, 4, 16, 16
    C_out = 8
    C_mid = C_out // 2

    key = jax.random.PRNGKey(0)
    k1, k2, k3, k4, k5 = jax.random.split(key, 5)
    x = jax.random.normal(k1, (N, C_in, H, W), jnp.float32)      # PyTorch NCHW

    # --- Config A: kernel=1, pad=0, dil=1 (typical oneConv instantiation; folded path) ---
    w1 = jax.random.normal(k2, (C_mid, C_in, 1, 1), jnp.float32) * 0.5
    b1 = jax.random.normal(k3, (C_mid,), jnp.float32) * 0.1
    w2 = jax.random.normal(k4, (C_out, C_mid, 1, 1), jnp.float32) * 0.5
    b2 = jax.random.normal(k5, (C_out,), jnp.float32) * 0.1

    out = one_conv_forward(x, w1, b1, w2, b2, kernel_size=1, padding=0, dilation=1)
    out = jax.block_until_ready(out)
    ref = one_conv_reference(x, w1, b1, w2, b2, padding=0, dilation=1)
    assert out.shape == (N, C_out, H, W)
    assert jnp.allclose(out, ref, atol=1e-4, rtol=1e-4), \
        f"config A max abs err {jnp.max(jnp.abs(out - ref))}"

    # --- Config B: kernel=3, pad=2, dil=2 (exercises roll + boundary-mask taps) ---
    kb = jax.random.split(jax.random.PRNGKey(1), 4)
    w1b = jax.random.normal(kb[0], (C_mid, C_in, 3, 3), jnp.float32) * 0.2
    b1b = jax.random.normal(kb[1], (C_mid,), jnp.float32) * 0.1
    w2b = jax.random.normal(kb[2], (C_out, C_mid, 3, 3), jnp.float32) * 0.2
    b2b = jax.random.normal(kb[3], (C_out,), jnp.float32) * 0.1

    outb = one_conv_forward(x, w1b, b1b, w2b, b2b, kernel_size=3, padding=2, dilation=2)
    outb = jax.block_until_ready(outb)
    refb = one_conv_reference(x, w1b, b1b, w2b, b2b, padding=2, dilation=2)
    assert outb.shape == (N, C_out, H, W)
    assert jnp.allclose(outb, refb, atol=1e-4, rtol=1e-4), \
        f"config B max abs err {jnp.max(jnp.abs(outb - refb))}"

    print("KERNEL_OK")
</pallas_src>

<mosaic_0001>
module attributes {stable_mosaic.version = 11 : i64} {
  func.func @kernel(%arg0: memref<2x4x256xf32, #tpu.memory_space<vmem>>, %arg1: memref<8x4xf32, #tpu.memory_space<vmem>>, %arg2: memref<8x1xf32, #tpu.memory_space<vmem>>, %arg3: memref<2x8x256xf32, #tpu.memory_space<vmem>>) attributes {dimension_semantics = [], scalar_prefetch = 0 : i64, scratch_operands = 0 : i64, tpu.core_type = #tpu.core_type<tc>} {
    %c0 = arith.constant 0 : index
    %c0_0 = arith.constant 0 : index
    %0 = vector.load %arg1[%c0, %c0_0] : memref<8x4xf32, #tpu.memory_space<vmem>>, vector<8x4xf32>
    %c0_1 = arith.constant 0 : index
    %c0_2 = arith.constant 0 : index
    %1 = vector.load %arg2[%c0_1, %c0_2] : memref<8x1xf32, #tpu.memory_space<vmem>>, vector<8x1xf32>
    %c0_3 = arith.constant 0 : index
    %c0_4 = arith.constant 0 : index
    %c0_5 = arith.constant 0 : index
    %2 = vector.load %arg0[%c0_3, %c0_4, %c0_5] : memref<2x4x256xf32, #tpu.memory_space<vmem>>, vector<1x4x256xf32>
    %3 = vector.shape_cast %2 : vector<1x4x256xf32> to vector<4x256xf32>
    %cst = arith.constant 0.000000e+00 : f32
    %4 = vector.broadcast %cst : f32 to vector<8x256xf32>
    %5 = vector.extract_strided_slice %0 {offsets = [0, 0], sizes = [8, 1], strides = [1, 1]} : vector<8x4xf32> to vector<8x1xf32>
    %6 = vector.extract_strided_slice %3 {offsets = [0, 0], sizes = [1, 256], strides = [1, 1]} : vector<4x256xf32> to vector<1x256xf32>
    %7 = vector.broadcast %5 : vector<8x1xf32> to vector<8x256xf32>
    %8 = vector.broadcast %6 : vector<1x256xf32> to vector<8x256xf32>
    %9 = arith.mulf %7, %8 : vector<8x256xf32>
    %10 = arith.addf %4, %9 : vector<8x256xf32>
    %11 = vector.extract_strided_slice %0 {offsets = [0, 1], sizes = [8, 1], strides = [1, 1]} : vector<8x4xf32> to vector<8x1xf32>
    %12 = vector.extract_strided_slice %3 {offsets = [1, 0], sizes = [1, 256], strides = [1, 1]} : vector<4x256xf32> to vector<1x256xf32>
    %13 = vector.broadcast %11 : vector<8x1xf32> to vector<8x256xf32>
    %14 = vector.broadcast %12 : vector<1x256xf32> to vector<8x256xf32>
    %15 = arith.mulf %13, %14 : vector<8x256xf32>
    %16 = arith.addf %10, %15 : vector<8x256xf32>
    %17 = vector.extract_strided_slice %0 {offsets = [0, 2], sizes = [8, 1], strides = [1, 1]} : vector<8x4xf32> to vector<8x1xf32>
    %18 = vector.extract_strided_slice %3 {offsets = [2, 0], sizes = [1, 256], strides = [1, 1]} : vector<4x256xf32> to vector<1x256xf32>
    %19 = vector.broadcast %17 : vector<8x1xf32> to vector<8x256xf32>
    %20 = vector.broadcast %18 : vector<1x256xf32> to vector<8x256xf32>
    %21 = arith.mulf %19, %20 : vector<8x256xf32>
    %22 = arith.addf %16, %21 : vector<8x256xf32>
    %23 = vector.extract_strided_slice %0 {offsets = [0, 3], sizes = [8, 1], strides = [1, 1]} : vector<8x4xf32> to vector<8x1xf32>
    %24 = vector.extract_strided_slice %3 {offsets = [3, 0], sizes = [1, 256], strides = [1, 1]} : vector<4x256xf32> to vector<1x256xf32>
    %25 = vector.broadcast %23 : vector<8x1xf32> to vector<8x256xf32>
    %26 = vector.broadcast %24 : vector<1x256xf32> to vector<8x256xf32>
    %27 = arith.mulf %25, %26 : vector<8x256xf32>
    %28 = arith.addf %22, %27 : vector<8x256xf32>
    %29 = vector.broadcast %1 : vector<8x1xf32> to vector<8x256xf32>
    %30 = arith.addf %28, %29 : vector<8x256xf32>
    %cst_6 = arith.constant 0.000000e+00 : f32
    %31 = vector.broadcast %cst_6 : f32 to vector<8x256xf32>
    %32 = arith.maximumf %30, %31 : vector<8x256xf32>
    %c0_7 = arith.constant 0 : index
    %c0_8 = arith.constant 0 : index
    %c0_9 = arith.constant 0 : index
    %33 = vector.load %arg3[%c0_7, %c0_8, %c0_9] : memref<2x8x256xf32, #tpu.memory_space<vmem>>, vector<1x8x256xf32>
    %34 = vector.shape_cast %33 : vector<1x8x256xf32> to vector<8x256xf32>
    %35 = vector.shape_cast %32 : vector<8x256xf32> to vector<1x8x256xf32>
    tpu.vector_store %arg3[%c0_7, %c0_8, %c0_9], %35 {strides = array<i32>} : memref<2x8x256xf32, #tpu.memory_space<vmem>>, vector<1x8x256xf32>,
    %c1 = arith.constant 1 : index
    %c0_10 = arith.constant 0 : index
    %c0_11 = arith.constant 0 : index
    %36 = vector.load %arg0[%c1, %c0_10, %c0_11] : memref<2x4x256xf32, #tpu.memory_space<vmem>>, vector<1x4x256xf32>
    %37 = vector.shape_cast %36 : vector<1x4x256xf32> to vector<4x256xf32>
    %cst_12 = arith.constant 0.000000e+00 : f32
    %38 = vector.broadcast %cst_12 : f32 to vector<8x256xf32>
    %39 = vector.extract_strided_slice %0 {offsets = [0, 0], sizes = [8, 1], strides = [1, 1]} : vector<8x4xf32> to vector<8x1xf32>
    %40 = vector.extract_strided_slice %37 {offsets = [0, 0], sizes = [1, 256], strides = [1, 1]} : vector<4x256xf32> to vector<1x256xf32>
    %41 = vector.broadcast %39 : vector<8x1xf32> to vector<8x256xf32>
    %42 = vector.broadcast %40 : vector<1x256xf32> to vector<8x256xf32>
    %43 = arith.mulf %41, %42 : vector<8x256xf32>
    %44 = arith.addf %38, %43 : vector<8x256xf32>
    %45 = vector.extract_strided_slice %0 {offsets = [0, 1], sizes = [8, 1], strides = [1, 1]} : vector<8x4xf32> to vector<8x1xf32>
    %46 = vector.extract_strided_slice %37 {offsets = [1, 0], sizes = [1, 256], strides = [1, 1]} : vector<4x256xf32> to vector<1x256xf32>
    %47 = vector.broadcast %45 : vector<8x1xf32> to vector<8x256xf32>
    %48 = vector.broadcast %46 : vector<1x256xf32> to vector<8x256xf32>
    %49 = arith.mulf %47, %48 : vector<8x256xf32>
    %50 = arith.addf %44, %49 : vector<8x256xf32>
    %51 = vector.extract_strided_slice %0 {offsets = [0, 2], sizes = [8, 1], strides = [1, 1]} : vector<8x4xf32> to vector<8x1xf32>
    %52 = vector.extract_strided_slice %37 {offsets = [2, 0], sizes = [1, 256], strides = [1, 1]} : vector<4x256xf32> to vector<1x256xf32>
    %53 = vector.broadcast %51 : vector<8x1xf32> to vector<8x256xf32>
    %54 = vector.broadcast %52 : vector<1x256xf32> to vector<8x256xf32>
    %55 = arith.mulf %53, %54 : vector<8x256xf32>
    %56 = arith.addf %50, %55 : vector<8x256xf32>
    %57 = vector.extract_strided_slice %0 {offsets = [0, 3], sizes = [8, 1], strides = [1, 1]} : vector<8x4xf32> to vector<8x1xf32>
    %58 = vector.extract_strided_slice %37 {offsets = [3, 0], sizes = [1, 256], strides = [1, 1]} : vector<4x256xf32> to vector<1x256xf32>
    %59 = vector.broadcast %57 : vector<8x1xf32> to vector<8x256xf32>
    %60 = vector.broadcast %58 : vector<1x256xf32> to vector<8x256xf32>
    %61 = arith.mulf %59, %60 : vector<8x256xf32>
    %62 = arith.addf %56, %61 : vector<8x256xf32>
    %63 = vector.broadcast %1 : vector<8x1xf32> to vector<8x256xf32>
    %64 = arith.addf %62, %63 : vector<8x256xf32>
    %cst_13 = arith.constant 0.000000e+00 : f32
    %65 = vector.broadcast %cst_13 : f32 to vector<8x256xf32>
    %66 = arith.maximumf %64, %65 : vector<8x256xf32>
    %c1_14 = arith.constant 1 : index
    %c0_15 = arith.constant 0 : index
    %c0_16 = arith.constant 0 : index
    %67 = vector.load %arg3[%c1_14, %c0_15, %c0_16] : memref<2x8x256xf32, #tpu.memory_space<vmem>>, vector<1x8x256xf32>
    %68 = vector.shape_cast %67 : vector<1x8x256xf32> to vector<8x256xf32>
    %69 = vector.shape_cast %66 : vector<8x256xf32> to vector<1x8x256xf32>
    tpu.vector_store %arg3[%c1_14, %c0_15, %c0_16], %69 {strides = array<i32>} : memref<2x8x256xf32, #tpu.memory_space<vmem>>, vector<1x8x256xf32>,
    return
  }
}

</mosaic_0001>

<llo_original>
// kernel: tpu_custom_call.1
$region0: #{tpu_custom_call.1}
  #allocation0 [shape = 'u32[]', space=smem, size = 0x4, offset = 0x4, fixed_abs, tag = 'smem constant byte address 0x4 - core index']
  #allocation1 [shape = 'u32[144,128]{1,0:T(1,128)}', space=vmem, size = 0x12000, scoped, tag = 'internal scratch']
  %s0 = inlined_call_operand.vmem [shape: f32[2,4,256], index: 0, kind: input, shape index: {}]
  %s1 = inlined_call_operand.vmem [shape: f32[8,4], index: 1, kind: input, shape index: {}]
  %s2 = inlined_call_operand.vmem [shape: f32[8,1], index: 2, kind: input, shape index: {}]
  %s3 = inlined_call_operand.hbm [shape: f32[2,8,256], index: 3, kind: output, shape index: {}]
  %s4 = sld [smem:[#allocation0]]
  $region22: #{tpu_custom_call.1} parent=0
    _
  %s6 = ssub.s32 1, %s4
  %s7 = scalar_select 0, %s6, %s4
  $region1: #{tpu_custom_call.1} parent=0
    #allocation2 [shape = 'u8[16384]{0}', space=vmem, size = 0x4000, scoped, tag = 'output window, operand 0, single buffered']
    #allocation3 [shape = 's32[1]{0}', space=sflag, size = 0x4, scoped, tag = 'scoped memory for tpu_custom_call.1']
    %8 = vsyncpa [#allocation3], 0
    // Predicated region
    $region2: #{tpu_custom_call.1} parent=1 // pred_check
      _
    $region3: #{tpu_custom_call.1} parent=1 // pred_check_branch
      %10 = sbr.rel (0) target = $region5
    $region4: #{tpu_custom_call.1} parent=1 // pred_region
      _
    $region5: #{tpu_custom_call.1} parent=1 // pred_fallthru
      _
    // Predicated region
    $region6: #{tpu_custom_call.1} parent=1 // pred_check
      _
    $region7: #{tpu_custom_call.1} parent=1 // pred_check_branch
      %12 = sbr.rel (0) target = $region9
    $region8: #{tpu_custom_call.1} parent=1 // pred_region
      _
    $region9: #{tpu_custom_call.1} parent=1 // pred_fallthru
      _
    // Predicated region
    $region10: #{tpu_custom_call.1} parent=1 // pred_check
      _
    $region11: #{tpu_custom_call.1} parent=1 // pred_check_branch
      %14 = sbr.rel (0) target = $region13
    $region12: #{tpu_custom_call.1} parent=1 // pred_region
      _
    $region13: #{tpu_custom_call.1} parent=1 // pred_fallthru
      _
    %v15 = vld [vmem:[%s1] sm:$0xff]
    %v16 = vld [vmem:[%s2] sm:$0xff]
    %v17 = vld [vmem:[%s0] sm:$0xff]
    %19 = vset.pattern.permute.xlu0 0
    %20 = vperm.xlu0 %19, %v15
    %v21 = vpop.permute.xlu0 %20
    %v24 = vlaneseq
    %v25 = vshrl.u32 %v24, 7
    %v26 = vsub.s32 0, %v25
    %v27 = vrot.slane %v17, %v26
    %v28 = vlaneseq
    %v29 = vshrl.u32 %v28, 7
    %v30 = vsub.s32 4, %v29
    %v31 = vrot.slane %v17, %v30
    %v34 = vlaneseq
    %v35 = vshrl.u32 %v34, 7
    %v36 = vsub.s32 0, %v35
    %v37 = vrot.slane %v27, %v36
    %v38 = vlaneseq
    %v39 = vshrl.u32 %v38, 7
    %v40 = vsub.s32 0, %v39
    %v41 = vrot.slane %v31, %v40
    %v42 = vmul.f32 %v21, %v37
    %v43 = vmul.f32 %v21, %v41
    %v44 = vadd.f32 %v42, 0.0
    %v45 = vadd.f32 %v43, 0.0
    %46 = vset.pattern.permute.xlu0 1
    %47 = vperm.xlu0 %46, %v15
    %v48 = vpop.permute.xlu0 %47
    %v50 = vlaneseq
    %v51 = vshrl.u32 %v50, 7
    %v52 = vsub.s32 1, %v51
    %v53 = vrot.slane %v17, %v52
    %v54 = vlaneseq
    %v55 = vshrl.u32 %v54, 7
    %v56 = vsub.s32 5, %v55
    %v57 = vrot.slane %v17, %v56
    %v60 = vlaneseq
    %v61 = vshrl.u32 %v60, 7
    %v62 = vsub.s32 1, %v61
    %v63 = vrot.slane %v53, %v62
    %v64 = vlaneseq
    %v65 = vshrl.u32 %v64, 7
    %v66 = vsub.s32 1, %v65
    %v67 = vrot.slane %v57, %v66
    %v68 = vmul.f32 %v48, %v63
    %v69 = vmul.f32 %v48, %v67
    %v70 = vadd.f32 %v44, %v68
    %v71 = vadd.f32 %v45, %v69
    %72 = vset.pattern.permute.xlu0 2
    %73 = vperm.xlu0 %72, %v15
    %v74 = vpop.permute.xlu0 %73
    %v76 = vlaneseq
    %v77 = vshrl.u32 %v76, 7
    %v78 = vsub.s32 2, %v77
    %v79 = vrot.slane %v17, %v78
    %v80 = vlaneseq
    %v81 = vshrl.u32 %v80, 7
    %v82 = vsub.s32 6, %v81
    %v83 = vrot.slane %v17, %v82
    %v86 = vlaneseq
    %v87 = vshrl.u32 %v86, 7
    %v88 = vsub.s32 2, %v87
    %v89 = vrot.slane %v79, %v88
    %v90 = vlaneseq
    %v91 = vshrl.u32 %v90, 7
    %v92 = vsub.s32 2, %v91
    %v93 = vrot.slane %v83, %v92
    %v94 = vmul.f32 %v74, %v89
    %v95 = vmul.f32 %v74, %v93
    %v96 = vadd.f32 %v70, %v94
    %v97 = vadd.f32 %v71, %v95
    %98 = vset.pattern.permute.xlu0 3
    %99 = vperm.xlu0 %98, %v15
    %v100 = vpop.permute.xlu0 %99
    %v102 = vlaneseq
    %v103 = vshrl.u32 %v102, 7
    %v104 = vsub.s32 3, %v103
    %v105 = vrot.slane %v17, %v104
    %v106 = vlaneseq
    %v107 = vshrl.u32 %v106, 7
    %v108 = vsub.s32 7, %v107
    %v109 = vrot.slane %v17, %v108
    %v112 = vlaneseq
    %v113 = vshrl.u32 %v112, 7
    %v114 = vsub.s32 3, %v113
    %v115 = vrot.slane %v105, %v114
    %v116 = vlaneseq
    %v117 = vshrl.u32 %v116, 7
    %v118 = vsub.s32 3, %v117
    %v119 = vrot.slane %v109, %v118
    %v120 = vmul.f32 %v100, %v115
    %v121 = vmul.f32 %v100, %v119
    %v122 = vadd.f32 %v96, %v120
    %v123 = vadd.f32 %v97, %v121
    %125 = vset.pattern.permute.xlu0 0
    %126 = vperm.xlu0 %125, %v16
    %v127 = vpop.permute.xlu0 %126
    %v129 = vadd.f32 %v122, %v127
    %v130 = vadd.f32 %v123, %v127
    %v131 = vmax.f32 %v129, 0.0
    %v132 = vmax.f32 %v130, 0.0
    %133 = vst [vmem:[#allocation2] sm:$0xff] %v131
    %134 = vst [vmem:[#allocation2 + $0x8] sm:$0xff] %v132
    %s135 = scalar_lea.vmem %s0, 8
    %v136 = vld [vmem:[%s135] sm:$0xff]
    %v138 = vlaneseq
    %v139 = vshrl.u32 %v138, 7
    %v140 = vsub.s32 0, %v139
    %v141 = vrot.slane %v136, %v140
    %v142 = vlaneseq
    %v143 = vshrl.u32 %v142, 7
    %v144 = vsub.s32 4, %v143
    %v145 = vrot.slane %v136, %v144
    %v148 = vlaneseq
    %v149 = vshrl.u32 %v148, 7
    %v150 = vsub.s32 0, %v149
    %v151 = vrot.slane %v141, %v150
    %v152 = vlaneseq
    %v153 = vshrl.u32 %v152, 7
    %v154 = vsub.s32 0, %v153
    %v155 = vrot.slane %v145, %v154
    %v156 = vmul.f32 %v21, %v151
    %v157 = vmul.f32 %v21, %v155
    %v158 = vadd.f32 %v156, 0.0
    %v159 = vadd.f32 %v157, 0.0
    %v160 = vlaneseq
    %v161 = vshrl.u32 %v160, 7
    %v162 = vsub.s32 1, %v161
    %v163 = vrot.slane %v136, %v162
    %v164 = vlaneseq
    %v165 = vshrl.u32 %v164, 7
    %v166 = vsub.s32 5, %v165
    %v167 = vrot.slane %v136, %v166
    %v170 = vlaneseq
    %v171 = vshrl.u32 %v170, 7
    %v172 = vsub.s32 1, %v171
    %v173 = vrot.slane %v163, %v172
    %v174 = vlaneseq
    %v175 = vshrl.u32 %v174, 7
    %v176 = vsub.s32 1, %v175
    %v177 = vrot.slane %v167, %v176
    %v178 = vmul.f32 %v48, %v173
    %v179 = vmul.f32 %v48, %v177
    %v180 = vadd.f32 %v158, %v178
    %v181 = vadd.f32 %v159, %v179
    %v182 = vlaneseq
    %v183 = vshrl.u32 %v182, 7
    %v184 = vsub.s32 2, %v183
    %v185 = vrot.slane %v136, %v184
    %v186 = vlaneseq
    %v187 = vshrl.u32 %v186, 7
    %v188 = vsub.s32 6, %v187
    %v189 = vrot.slane %v136, %v188
    %v192 = vlaneseq
    %v193 = vshrl.u32 %v192, 7
    %v194 = vsub.s32 2, %v193
    %v195 = vrot.slane %v185, %v194
    %v196 = vlaneseq
    %v197 = vshrl.u32 %v196, 7
    %v198 = vsub.s32 2, %v197
    %v199 = vrot.slane %v189, %v198
    %v200 = vmul.f32 %v74, %v195
    %v201 = vmul.f32 %v74, %v199
    %v202 = vadd.f32 %v180, %v200
    %v203 = vadd.f32 %v181, %v201
    %v204 = vlaneseq
    %v205 = vshrl.u32 %v204, 7
    %v206 = vsub.s32 3, %v205
    %v207 = vrot.slane %v136, %v206
    %v208 = vlaneseq
    %v209 = vshrl.u32 %v208, 7
    %v210 = vsub.s32 7, %v209
    %v211 = vrot.slane %v136, %v210
    %v214 = vlaneseq
    %v215 = vshrl.u32 %v214, 7
    %v216 = vsub.s32 3, %v215
    %v217 = vrot.slane %v207, %v216
    %v218 = vlaneseq
    %v219 = vshrl.u32 %v218, 7
    %v220 = vsub.s32 3, %v219
    %v221 = vrot.slane %v211, %v220
    %v222 = vmul.f32 %v100, %v217
    %v223 = vmul.f32 %v100, %v221
    %v224 = vadd.f32 %v202, %v222
    %v225 = vadd.f32 %v203, %v223
    %v226 = vadd.f32 %v224, %v127
    %v227 = vadd.f32 %v225, %v127
    %v228 = vmax.f32 %v226, 0.0
    %v229 = vmax.f32 %v227, 0.0
    %s230 = scalar_lea.vmem [#allocation2], 16
    %231 = vst [vmem:[%s230] sm:$0xff] %v228
    %232 = vst [vmem:[%s230 + $0x8] sm:$0xff] %v229
    // Predicated region
    $region14: #{tpu_custom_call.1} parent=1 // pred_check
      _
    $region15: #{tpu_custom_call.1} parent=1 // pred_check_branch
      %234 = sbr.rel (0) target = $region17
    $region16: #{tpu_custom_call.1} parent=1 // pred_region
      %s236 = ssub.s32 512, 512
      %237 = vsyncadd [#allocation3], %s236
      %s238 = sshll.u32 [#allocation2], 4
      %s239 = int_to_ptr.vmem [resolvable:$true] %s238
      %244 = dma.vmem_to_hbm [thread:$0]  %s239, 512, %s3, [#allocation3], 256, 256, 16
    $region17: #{tpu_custom_call.1} parent=1 // pred_fallthru
      _
    // Predicated region
    $region18: #{tpu_custom_call.1} parent=1 // pred_check
      _
    $region19: #{tpu_custom_call.1} parent=1 // pred_check_branch
      %246 = sbr.rel (0) target = $region21
    $region20: #{tpu_custom_call.1} parent=1 // pred_region
      %247 = dma.done [#allocation3], 512
    $region21: #{tpu_custom_call.1} parent=1 // pred_fallthru
      _
    %248 = vsyncpa [#allocation3], 1

</llo_original>
